<compile_context>
chip_gen: v5e
topology: v5e:2x2
jax: 0.10.0
libtpu: 0.0.40
codegen_flags: <defaults>
</compile_context>

<pallas_src>
import math

import jax
import jax.numpy as jnp
from jax.experimental import pallas as pl
from jax.experimental.pallas import tpu as pltpu


def _round_up(x, m):
    return ((x + m - 1) // m) * m


def _fourier_kernel(x_ref, w2_ref, phase_ref, o_ref):
    # x_ref     : (TM, K)             f32
    # w2_ref    : (K, out_features)   f32  == [2*pi*W^T | 2*pi*W^T]   (resident)
    # phase_ref : (1, out_features)   f32  == [pi/2 ... | 0 ...]      (resident)
    # o_ref     : (TM, out_features)  f32
    f = jnp.dot(x_ref[...], w2_ref[...], preferred_element_type=jnp.float32)
    # sin(f + pi/2) == cos(f): one EUP pass, one full lane-dense slab store.
    o_ref[...] = jnp.sin(f + phase_ref[...])


def prepare_fourier_params(weight):
    """One-time parameter prep (outside the hot path).

    weight: (out_features // 2, in_features)  ->
      w2    : (in_features, out_features) = [2*pi*W^T | 2*pi*W^T]
      phase : (1, out_features)           = [pi/2]*half + [0]*half
    """
    half, _ = weight.shape
    wt = (2.0 * math.pi) * weight.T.astype(jnp.float32)          # (K, half)
    w2 = jnp.concatenate([wt, wt], axis=1)                       # (K, 2*half)
    phase = jnp.concatenate(
        [jnp.full((1, half), math.pi / 2.0, jnp.float32),
         jnp.zeros((1, half), jnp.float32)],
        axis=1,
    )
    return w2, phase


def _pick_tm(B, in_features, out_features, *, tile_budget_bytes=32 * 1024 * 1024):
    """Pick a batch tile using padded tile footprints (lane/sublane padding)."""
    k_pad = _round_up(in_features, 128)     # x tile lane padding
    n_pad = _round_up(out_features, 128)    # output tile lane padding
    # Double-buffered f32 bytes per batch row (x tile + output tile), padded.
    per_row = 2 * 4 * (k_pad + n_pad)
    # Resident weight + phase (count x2 for buffer bookkeeping headroom).
    fixed = 2 * 4 * (_round_up(in_features, 8) * n_pad + 8 * n_pad)
    budget = max(tile_budget_bytes - fixed, per_row)
    tm = max(8, budget // per_row)
    tm = min(tm, 2048)                      # roofline flattens; keep steps modest
    if B < 16 and B <= tm:
        return B                            # full-batch single block (small B)
    # Guarantee >= 2 grid steps so "parallel" can split batch over v7x's 2 TCs.
    tm = min(tm, _round_up(pl.cdiv(B, 2), 8))
    tm = max(8, (tm // 8) * 8)              # sublane rule for the tiled path
    return tm


def _vmem_limit_bytes(tm, in_features, out_features):
    k_pad = _round_up(in_features, 128)
    n_pad = _round_up(out_features, 128)
    tiles = 2 * 4 * tm * (k_pad + n_pad)                          # double-buffered
    fixed = 2 * 4 * (_round_up(in_features, 8) * n_pad + 8 * n_pad)
    limit = tiles + fixed + 4 * 1024 * 1024                       # headroom
    # Clamp: at least the default-ish scoped budget, at most safe on v7x (64 MiB).
    return int(min(48 * 1024 * 1024, max(32 * 1024 * 1024, limit)))


def fourier_features(x, w2, phase, *, tm=None):
    """x: (B, in_features) f32, w2: (K, out_features), phase: (1, out_features)."""
    B, K = x.shape
    K_w, out_features = w2.shape
    assert K == K_w and phase.shape == (1, out_features)

    if tm is None:
        tm = _pick_tm(B, K, out_features)
    grid = (pl.cdiv(B, tm),)

    cost = pl.CostEstimate(
        flops=2 * B * K * out_features,
        transcendentals=B * out_features,
        bytes_accessed=4 * (B * K + K * out_features + out_features + B * out_features),
    )

    return pl.pallas_call(
        _fourier_kernel,
        out_shape=jax.ShapeDtypeStruct((B, out_features), jnp.float32),
        grid_spec=pltpu.PrefetchScalarGridSpec(
            num_scalar_prefetch=0,
            grid=grid,
            in_specs=[
                pl.BlockSpec((tm, K), lambda i: (i, 0)),
                pl.BlockSpec((K, out_features), lambda i: (0, 0)),   # resident weight
                pl.BlockSpec((1, out_features), lambda i: (0, 0)),   # resident phase row
            ],
            out_specs=pl.BlockSpec((tm, out_features), lambda i: (i, 0)),
        ),
        compiler_params=pltpu.CompilerParams(
            dimension_semantics=("parallel",),                 # v7x: batch over 2 TCs
            vmem_limit_bytes=_vmem_limit_bytes(tm, K, out_features),
        ),
        cost_estimate=cost,
    )(x, w2, phase)


def fourier_features_ref(x, weight):
    f = 2.0 * math.pi * (x @ weight.T)
    return jnp.concatenate([jnp.cos(f), jnp.sin(f)], axis=-1)


if __name__ == "__main__":
    key = jax.random.PRNGKey(0)
    k_x, k_w = jax.random.split(key)

    batch = 8
    in_features = 4
    out_features = 32
    std = 1.0

    # Deterministic "parameter" init mirroring torch.randn(...) * std.
    weight = jax.random.normal(k_w, (out_features // 2, in_features), jnp.float32) * std
    x = jax.random.normal(k_x, (batch, in_features), jnp.float32)

    # One-time parameter prep (outside the hot path).
    w2, phase = prepare_fourier_params(weight)

    out = fourier_features(x, w2, phase)
    out = jax.block_until_ready(out)

    ref = fourier_features_ref(x, weight)
    assert out.shape == (batch, out_features), out.shape
    assert jnp.allclose(out, ref, atol=1e-5, rtol=1e-5), float(jnp.max(jnp.abs(out - ref)))

    print("KERNEL_OK")
</pallas_src>

<mosaic_0001>
module attributes {stable_mosaic.version = 11 : i64} {
  func.func @_fourier_kernel(%arg0: i32, %arg1: memref<8x4xf32, #tpu.memory_space<vmem>>, %arg2: memref<4x32xf32, #tpu.memory_space<vmem>>, %arg3: memref<1x32xf32, #tpu.memory_space<vmem>>, %arg4: memref<8x32xf32, #tpu.memory_space<vmem>>) attributes {dimension_semantics = [#tpu.dimension_semantics<parallel>], iteration_bounds = array<i64: 1>, scalar_prefetch = 0 : i64, scratch_operands = 0 : i64, tpu.core_type = #tpu.core_type<tc>, window_params = [{transform_indices = @transform_0, window_bounds = array<i64: 8, 4>}, {pipeline_mode = #tpu.pipeline_mode<synchronous>, transform_indices = @transform_1, window_bounds = array<i64: 4, 32>}, {pipeline_mode = #tpu.pipeline_mode<synchronous>, transform_indices = @transform_2, window_bounds = array<i64: 1, 32>}, {transform_indices = @transform_3, window_bounds = array<i64: 8, 32>}]} {
    %c0 = arith.constant 0 : index
    %c0_0 = arith.constant 0 : index
    %0 = vector.load %arg1[%c0, %c0_0] : memref<8x4xf32, #tpu.memory_space<vmem>>, vector<8x4xf32>
    %c0_1 = arith.constant 0 : index
    %c0_2 = arith.constant 0 : index
    %1 = vector.load %arg2[%c0_1, %c0_2] : memref<4x32xf32, #tpu.memory_space<vmem>>, vector<4x32xf32>
    %cst = arith.constant dense<0.000000e+00> : vector<8x32xf32>
    %2 = tpu.matmul %0, %1, %cst {dimension_numbers = #tpu.dot_dimension_numbers<[1], [0], [0], [1], [0, 0, 1, 1], [], []>} : vector<8x4xf32>, vector<4x32xf32>, vector<8x32xf32> -> vector<8x32xf32>
    %c0_3 = arith.constant 0 : index
    %c0_4 = arith.constant 0 : index
    %3 = vector.load %arg3[%c0_3, %c0_4] : memref<1x32xf32, #tpu.memory_space<vmem>>, vector<1x32xf32>
    %4 = vector.broadcast %3 : vector<1x32xf32> to vector<8x32xf32>
    %5 = arith.addf %2, %4 : vector<8x32xf32>
    %6 = math.sin %5 : vector<8x32xf32>
    %c0_5 = arith.constant 0 : index
    %c0_6 = arith.constant 0 : index
    %7 = vector.load %arg4[%c0_5, %c0_6] : memref<8x32xf32, #tpu.memory_space<vmem>>, vector<8x32xf32>
    tpu.vector_store %arg4[%c0_5, %c0_6], %6 {strides = array<i32>} : memref<8x32xf32, #tpu.memory_space<vmem>>, vector<8x32xf32>,
    return
  }
  func.func @transform_0(%arg0: i32) -> (i32, i32) {
    %c0_i32 = arith.constant 0 : i32
    %c0_i32_0 = arith.constant 0 : i32
    return %arg0, %c0_i32 : i32, i32
  }
  func.func @transform_1(%arg0: i32) -> (i32, i32) {
    %c0_i32 = arith.constant 0 : i32
    %c0_i32_0 = arith.constant 0 : i32
    %c0_i32_1 = arith.constant 0 : i32
    return %c0_i32, %c0_i32_0 : i32, i32
  }
  func.func @transform_2(%arg0: i32) -> (i32, i32) {
    %c0_i32 = arith.constant 0 : i32
    %c0_i32_0 = arith.constant 0 : i32
    %c0_i32_1 = arith.constant 0 : i32
    return %c0_i32, %c0_i32_0 : i32, i32
  }
  func.func @transform_3(%arg0: i32) -> (i32, i32) {
    %c0_i32 = arith.constant 0 : i32
    %c0_i32_0 = arith.constant 0 : i32
    return %arg0, %c0_i32 : i32, i32
  }
}

</mosaic_0001>

<llo_original>
// kernel: tpu_custom_call.1
$region0: #{tpu_custom_call.1}
  #allocation0 [shape = 'u32[]', space=smem, size = 0x4, offset = 0x4, fixed_abs, tag = 'smem constant byte address 0x4 - core index']
  #allocation1 [shape = 'u32[72,128]{1,0:T(1,128)}', space=vmem, size = 0x9000, scoped, tag = 'internal scratch']
  %s0 = inlined_call_operand.vmem [shape: f32[8,4], index: 0, kind: input, shape index: {}]
  %s1 = inlined_call_operand.vmem [shape: f32[4,32], index: 1, kind: input, shape index: {}]
  %s2 = inlined_call_operand.vmem [shape: f32[1,32], index: 2, kind: input, shape index: {}]
  %s3 = inlined_call_operand.hbm [shape: f32[8,32], index: 3, kind: output, shape index: {}]
  %s4 = sld [smem:[#allocation0]]
  $region22: #{tpu_custom_call.1} parent=0
    _
  %s6 = ssub.s32 1, %s4
  %s7 = scalar_select 0, %s6, %s4
  $region1: #{tpu_custom_call.1} parent=0
    #allocation2 [shape = 'u8[4096]{0}', space=vmem, size = 0x1000, scoped, tag = 'output window, operand 0, single buffered']
    #allocation3 [shape = 's32[1]{0}', space=sflag, size = 0x4, scoped, tag = 'scoped memory for tpu_custom_call.1']
    %8 = vsyncpa [#allocation3], 0
    // Predicated region
    $region2: #{tpu_custom_call.1} parent=1 // pred_check
      _
    $region3: #{tpu_custom_call.1} parent=1 // pred_check_branch
      %10 = sbr.rel (0) target = $region5
    $region4: #{tpu_custom_call.1} parent=1 // pred_region
      _
    $region5: #{tpu_custom_call.1} parent=1 // pred_fallthru
      _
    // Predicated region
    $region6: #{tpu_custom_call.1} parent=1 // pred_check
      _
    $region7: #{tpu_custom_call.1} parent=1 // pred_check_branch
      %12 = sbr.rel (0) target = $region9
    $region8: #{tpu_custom_call.1} parent=1 // pred_region
      _
    $region9: #{tpu_custom_call.1} parent=1 // pred_fallthru
      _
    // Predicated region
    $region10: #{tpu_custom_call.1} parent=1 // pred_check
      _
    $region11: #{tpu_custom_call.1} parent=1 // pred_check_branch
      %14 = sbr.rel (0) target = $region13
    $region12: #{tpu_custom_call.1} parent=1 // pred_region
      _
    $region13: #{tpu_custom_call.1} parent=1 // pred_fallthru
      _
    %v15 = vld [vmem:[%s0] sm:$0xff]
    %v16 = vld [vmem:[%s1] sm:$0xf]
    %v17 = vld [vmem:[%s2] sm:$0x1]
    %v19 = vperm.slane %v17, 0
    %vm21 = vcmask 31744
    %v23 = vsel %vm21, %v15, 0
    %vm25 = vcmask 1043456
    %v27 = vsel %vm25, %v16, 0
    %29 = vmatpush.msra.mxu0 0.0
    %30 = vmatpush.msra.mxu0 0.0
    %31 = vmatpush.msra.mxu0 0.0
    %32 = vmatpush.msra.mxu0 0.0
    %33 = vmatpush.msra.mxu0 0.0
    %34 = vmatpush.msra.mxu0 0.0
    %35 = vmatpush.msra.mxu0 0.0
    %36 = vmatpush.msra.mxu0 0.0
    %37 = vmatpush.msra.mxu0 0.0
    %38 = vmatpush.msra.mxu0 0.0
    %39 = vmatpush.msra.mxu0 0.0
    %40 = vmatpush.msra.mxu0 0.0
    %41 = vmatpush.msra.mxu0 0.0
    %42 = vmatpush.msra.mxu0 0.0
    %43 = vmatpush.msra.mxu0 0.0
    %44 = vmatpush.msra.mxu0 %v27
    %45 = vmatmul.f32.gmra.mxu0 %v23
    %v46 = vpop.f32.mrf.mxu0
    %v47 = vadd.f32 %v19, %v46
    %48 = vdwg.mxu0
    %v49 = vand.u32 2147483647, %v47
    %vm50 = vcmp.le.f32.partialorder %v49, 0.7853982
    %vm51 = vcmp.lt.s32.totalorder %v47, 0
    %v52 = vand.u32 %v47, 2139095040
    %v53 = vshrl.u32 %v52, 23
    %v54 = vsub.s32 %v53, 127
    %v55 = vand.u32 2147483647, %v47
    %v56 = vand.u32 %v55, 8388607
    %v57 = vor.u32 %v56, 8388608
    %v58 = vsub.s32 0, %v57
    %v59 = vadd.s32 %v54, 1
    %vm60 = vcmp.gt.s32.totalorder %v59, 0
    %v61 = vsel %vm60, %v59, 0
    %v62 = vshrl.u32 %v61, 5
    %v63 = vand.u32 %v61, 31
    %v64 = vsub.s32 32, %v63
    %v65 = vshrl.u32 683565275, %v64
    %v66 = vshll.u32 683565275, %v63
    %v67 = vshrl.u32 2475754826, %v64
    %v68 = vor.u32 %v66, %v67
    %v69 = vshll.u32 2475754826, %v63
    %v70 = vshrl.u32 2131351028, %v64
    %v71 = vor.u32 %v69, %v70
    %v72 = vshll.u32 2131351028, %v63
    %v73 = vshrl.u32 2102212464, %v64
    %v74 = vor.u32 %v72, %v73
    %v75 = vshll.u32 2102212464, %v63
    %v76 = vshrl.u32 920167782, %v64
    %v77 = vor.u32 %v75, %v76
    %v78 = vshll.u32 920167782, %v63
    %v79 = vshrl.u32 1326507024, %v64
    %v80 = vor.u32 %v78, %v79
    %vm81 = vcmp.lt.s32.totalorder %v62, 1
    %vm82 = vcmp.lt.s32.totalorder %v62, 2
    %vm83 = vcmp.lt.s32.totalorder %v62, 3
    %vm84 = vcmp.lt.s32.totalorder %v62, 4
    %v85 = vsel %vm81, %v65, %v68
    %v86 = vsel %vm84, %v74, 2102212464
    %v87 = vsel %vm83, %v71, %v86
    %v88 = vsel %vm82, %v85, %v87
    %v89 = vsel %vm81, %v68, %v71
    %v90 = vsel %vm84, %v77, 920167782
    %v91 = vsel %vm83, %v74, %v90
    %v92 = vsel %vm82, %v89, %v91
    %v93 = vsel %vm81, %v71, %v74
    %v94 = vsel %vm84, %v80, 1326507024
    %v95 = vsel %vm83, %v77, %v94
    %v96 = vsel %vm82, %v93, %v95
    %v97 = vshll.u32 %v57, 8
    %v98 = vand.u32 %v97, 65535
    %v99 = vshrl.u32 %v97, 16
    %v100 = vand.u32 %v96, 65535
    %v101 = vshrl.u32 %v96, 16
    %v102 = vmul.u32 %v98, %v100
    %v103 = vmul.u32 %v98, %v101
    %v104 = vmul.u32 %v99, %v100
    %v105 = vmul.u32 %v99, %v101
    %v106 = vshll.u32 %v103, 16
    %v107 = vshrl.u32 %v103, 16
    %v108 = vshll.u32 %v104, 16
    %v109 = vshrl.u32 %v104, 16
    %vm110 = vc.u32 %v102, %v106
    %v111 = vsel %vm110, 1, 0
    %v112 = vadd.s32 %v102, %v106
    %v113 = vadd.s32 %v105, %v111
    %vm114 = vc.u32 %v112, %v108
    %v115 = vsel %vm114, 1, 0
    %v116 = vadd.s32 %v112, %v108
    %v117 = vadd.s32 %v113, %v115
    %v118 = vadd.s32 %v117, %v107
    %v119 = vadd.s32 %v118, %v109
    %v120 = vand.u32 %v97, 65535
    %v121 = vshrl.u32 %v97, 16
    %v122 = vand.u32 %v92, 65535
    %v123 = vshrl.u32 %v92, 16
    %v124 = vmul.u32 %v120, %v122
    %v125 = vmul.u32 %v120, %v123
    %v126 = vmul.u32 %v121, %v122
    %v127 = vmul.u32 %v121, %v123
    %v128 = vshll.u32 %v125, 16
    %v129 = vshrl.u32 %v125, 16
    %v130 = vshll.u32 %v126, 16
    %v131 = vshrl.u32 %v126, 16
    %vm132 = vc.u32 %v124, %v128
    %v133 = vsel %vm132, 1, 0
    %v134 = vadd.s32 %v124, %v128
    %v135 = vadd.s32 %v127, %v133
    %vm136 = vc.u32 %v134, %v130
    %v137 = vsel %vm136, 1, 0
    %v138 = vadd.s32 %v134, %v130
    %v139 = vadd.s32 %v135, %v137
    %v140 = vadd.s32 %v139, %v129
    %v141 = vadd.s32 %v140, %v131
    %v142 = vmul.u32 %v97, %v88
    %v143 = vadd.s32 %v119, %v138
    %vm144 = vc.u32 %v119, %v138
    %v145 = vadd.s32 %v141, 1
    %v146 = vsel %vm144, %v145, %v141
    %v147 = vadd.s32 %v142, %v146
    %v148 = vadd.s32 %v147, 536870912
    %v149 = vshrl.u32 %v148, 30
    %v150 = vshll.u32 %v149, 30
    %v151 = vsub.s32 %v147, %v150
    %vm152 = vcmp.lt.s32.totalorder %v151, 0
    %v153 = vsub.s32 0, %v151
    %v154 = vsel %vm152, %v153, %v151
    %v155 = vclz %v154
    %v156 = vsub.s32 %v155, 2
    %vm157 = vcmp.gt.s32.totalorder 0, %v156
    %v158 = vsel %vm157, 0, %v156
    %v159 = vsub.s32 32, %v158
    %v160 = vshll.u32 %v151, %v158
    %v161 = vshrl.u32 %v143, %v159
    %v162 = vor.u32 %v160, %v161
    %v163 = vsub.s32 4294967266, %v158
    %v164 = vadd.s32 %v163, 127
    %v165 = vshll.u32 %v164, 23
    %v166 = vor.u32 4788187, %v165
    %v167 = vand.u32 2147483647, %v166
    %v169 = vcvt.s32.f32 %v162
    %v170 = vmul.f32 %v169, %v167
    %v171 = vxor.u32 %v170, 2147483648
    %v172 = vsel %vm51, %v171, %v170
    %v173 = vsub.s32 4, %v149
    %v174 = vsel %vm51, %v173, %v149
    %v175 = vsel %vm50, %v47, %v172
    %v176 = vsel %vm50, 0, %v174
    %v177 = vmul.f32 %v175, %v175
    %v178 = vmul.f32 %v177, -0.001358992
    %v179 = vadd.f32 %v178, 0.041655596
    %v180 = vmul.f32 %v177, %v179
    %v181 = vadd.f32 %v180, -0.4999988
    %v182 = vmul.f32 %v177, %v181
    %v183 = vadd.f32 1.0, %v182
    %v184 = vmul.f32 %v175, %v175
    %v185 = vmul.f32 %v184, -0.00019511016
    %v186 = vadd.f32 %v185, 0.008332121
    %v187 = vmul.f32 %v184, %v186
    %v188 = vadd.f32 %v187, -0.16666654
    %v189 = vmul.f32 %v184, %v188
    %v190 = vadd.f32 %v189, 1.0
    %v191 = vmul.f32 %v190, %v175
    %vm192 = vweird.f32 %v47
    %v193 = vadd.s32 %v176, 3
    %v194 = vand.u32 %v193, 3
    %vm195 = vcmp.lt.s32.totalorder %v194, 2
    %vm196 = vcmp.eq.s32.totalorder %v194, 0
    %v197 = vxor.u32 %v191, 2147483648
    %v198 = vsel %vm196, %v183, %v197
    %vm199 = vcmp.eq.s32.totalorder %v194, 2
    %v200 = vxor.u32 %v183, 2147483648
    %v201 = vsel %vm199, %v200, %v191
    %v202 = vsel %vm195, %v198, %v201
    %v203 = vsel %vm192, nan, %v202
    %vm204 = vcmask 261120
    %205 = vst.msk [vmem:[#allocation2] sm:$0xff] %vm204, %v203
    // Predicated region
    $region14: #{tpu_custom_call.1} parent=1 // pred_check
      _
    $region15: #{tpu_custom_call.1} parent=1 // pred_check_branch
      %207 = sbr.rel (0) target = $region17
    $region16: #{tpu_custom_call.1} parent=1 // pred_region
      %209 = vsyncadd [#allocation3], 0
      %s211 = sshll.u32 [#allocation2], 4
      %s212 = int_to_ptr.vmem [resolvable:$true] %s211
      %s213 = sshll.u32 %s3, 4
      %s214 = int_to_ptr.hbm [resolvable:$true] %s213
      %216 = dma.vmem_to_hbm [thread:$0]  %s212, 128, %s214, [#allocation3]
    $region17: #{tpu_custom_call.1} parent=1 // pred_fallthru
      _
    // Predicated region
    $region18: #{tpu_custom_call.1} parent=1 // pred_check
      _
    $region19: #{tpu_custom_call.1} parent=1 // pred_check_branch
      %218 = sbr.rel (0) target = $region21
    $region20: #{tpu_custom_call.1} parent=1 // pred_region
      %220 = dma.done [#allocation3], 128
    $region21: #{tpu_custom_call.1} parent=1 // pred_fallthru
      _
    %221 = vsyncpa [#allocation3], 1

</llo_original>
